<compile_context>
chip_gen: v7x
topology: tpu7x:2x2x1
jax: 0.10.0
libtpu: 0.0.40
codegen_flags: <defaults>
</compile_context>

<pallas_src>
import jax
import jax.numpy as jnp
from jax.experimental import pallas as pl
from jax.experimental.pallas import tpu as pltpu

_MiB = 1 << 20


def _per_channel_broadcast_kernel(w_col_ref, o_ref):
    # w_col_ref: VMEM (TR, 1) per-row weights (one row per (b, c) pair).
    # o_ref:     VMEM (TR, TL) lane-dense output tile.
    # One VPU lane-broadcast + one full-width store; nothing else.
    o_ref[...] = jnp.broadcast_to(w_col_ref[...], o_ref.shape)


def _round_down(x: int, m: int) -> int:
    return (x // m) * m


def _round_up(x: int, m: int) -> int:
    return ((x + m - 1) // m) * m


def _tpu_params():
    """(per-tile byte target, multi_tensorcore) for the local TPU generation."""
    kind = ""
    try:
        kind = jax.devices()[0].device_kind.lower().replace(" ", "")
    except Exception:
        pass
    if "v7" in kind or "tpu7" in kind:
        # 64 MiB physical VMEM, 3.2 TB/s HBM, 2 TensorCores per chip.
        return 14 * _MiB, True
    if "v6" in kind:
        # 128 MiB VMEM, ~1.4 TB/s HBM, single TC.
        return 10 * _MiB, False
    if "v5" in kind:
        # 16 MiB scoped-VMEM default, ~0.8 TB/s HBM, single TC.
        return 5 * _MiB, False
    # Unknown generation: conservative.
    return 4 * _MiB, False


def _pick_tiles(rows, lanes, itemsize, target_bytes, multi_core):
    """Pick (tr, tl) output block shape: tr multiple of the dtype packing (or
    == rows), tl multiple of 128 (or == lanes), tr*tl*itemsize ~ target."""
    packing = max(8, 32 // max(itemsize, 1))          # sublanes per vreg row-group
    budget = max(target_bytes // itemsize, packing * 128)   # elements per tile

    # Lane (last-dim) tile: keep full width when one packing-row slab fits the
    # budget; otherwise tile the lane axis in multiples of 128.
    if lanes <= 128 or packing * lanes <= budget:
        tl = lanes
    else:
        tl = max(128, _round_down(budget // packing, 128))   # < lanes by construction

    # Row (second-to-last) tile.
    if tl == lanes:
        tr = max(packing, _round_down(budget // max(lanes, 1), packing))
    else:
        tr = packing
    if tr >= rows:
        tr = rows            # single row block: full extent (always legal)

    # Guarantee >=2 grid blocks only on multi-TensorCore parts (v7x megacore).
    if multi_core:
        n_blocks = pl.cdiv(rows, tr) * pl.cdiv(lanes, tl)
        if n_blocks < 2:
            if rows > packing:
                tr = min(tr, _round_up((rows + 1) // 2, packing))
            elif lanes > 128 and tl == lanes:
                tl = _round_up((lanes + 1) // 2, 128)
    return tr, tl


def per_channel_weight_forward(weight, latent_shape, *, min_pallas_bytes=1 * _MiB):
    """weight: (1, C, 1, 1) array.  latent_shape: (B, C, H, W) tuple."""
    B, C, H, W = latent_shape
    assert weight.shape[1] == C, "channel length mismatch"

    dtype = weight.dtype
    itemsize = jnp.dtype(dtype).itemsize
    rows = B * C          # one row per (batch, channel) pair, NCHW row-major
    lanes = H * W         # lane-dense last dim

    total_bytes = rows * lanes * itemsize
    if total_bytes < min_pallas_bytes:
        # Small-problem bypass: pallas_call launch overhead would dominate.
        return jnp.broadcast_to(weight, tuple(latent_shape))

    target_bytes, multi_core = _tpu_params()
    tr, tl = _pick_tiles(rows, lanes, itemsize, target_bytes, multi_core)
    grid = (pl.cdiv(rows, tr), pl.cdiv(lanes, tl))

    # Per-row weight column: row r = b*C + c  ->  weight[c].  Glue in plain JAX.
    w_col = jnp.broadcast_to(weight.reshape(1, C), (B, C)).reshape(rows, 1)

    # vmem limit derived from the actual chosen tile (2x double-buffered output
    # + slack), so the per-generation tile targets never hit the scoped default.
    tile_bytes = tr * tl * itemsize
    vmem_limit = int(max(16 * _MiB, min(2 * tile_bytes + 6 * _MiB, 48 * _MiB)))

    out2d = pl.pallas_call(
        _per_channel_broadcast_kernel,
        out_shape=jax.ShapeDtypeStruct((rows, lanes), dtype),
        grid=grid,
        in_specs=[
            # Constant block index along the lane axis -> DMA re-issued only
            # when the row block changes (effectively resident tiny column).
            pl.BlockSpec((tr, 1), lambda i, j: (i, 0)),
        ],
        out_specs=pl.BlockSpec((tr, tl), lambda i, j: (i, j)),
        compiler_params=pltpu.CompilerParams(
            dimension_semantics=("parallel", "parallel"),
            vmem_limit_bytes=vmem_limit,
        ),
        cost_estimate=pl.CostEstimate(
            flops=0,
            transcendentals=0,
            bytes_accessed=rows * lanes * itemsize + rows * itemsize,
        ),
    )(w_col)

    # Row-major (B*C, H*W) -> (B, C, H, W): pure metadata reshape outside the kernel.
    return out2d.reshape(B, C, H, W)


if __name__ == "__main__":
    key = jax.random.PRNGKey(0)
    num_channels = 4
    latent_shape = (2, num_channels, 16, 16)  # (B, C, H, W)

    # Deterministic parameter init, matching torch.rand((1, C, 1, 1)) ~ U[0,1).
    weight = jax.random.uniform(
        key, (1, num_channels, 1, 1), dtype=jnp.float32, minval=0.0, maxval=1.0
    )

    # 1) Force the Pallas path even at this tiny size so the kernel actually runs.
    out = per_channel_weight_forward(weight, latent_shape, min_pallas_bytes=0)
    out = jax.block_until_ready(out)
    ref = jnp.broadcast_to(weight, latent_shape)
    assert out.shape == latent_shape
    assert out.dtype == weight.dtype
    assert jnp.allclose(out, ref), "mismatch vs reference broadcast (case 1)"

    # 2) Non-divisible row count / wider lanes (exercises partial row blocks
    #    and the lane-tiling logic), still forced through the Pallas path.
    latent_shape2 = (3, num_channels, 24, 32)  # rows=12, lanes=768
    out2 = jax.block_until_ready(
        per_channel_weight_forward(weight, latent_shape2, min_pallas_bytes=0)
    )
    ref2 = jnp.broadcast_to(weight, latent_shape2)
    assert out2.shape == latent_shape2
    assert jnp.allclose(out2, ref2), "mismatch vs reference broadcast (case 2)"

    # 3) Default auto path (small-problem bypass) has identical semantics.
    out3 = jax.block_until_ready(per_channel_weight_forward(weight, latent_shape))
    assert jnp.allclose(out3, ref), "mismatch vs reference broadcast (bypass)"

    print("KERNEL_OK")
</pallas_src>

<mosaic_0001>
module attributes {stable_mosaic.version = 11 : i64} {
  func.func @_per_channel_broadcast_kernel(%arg0: i32, %arg1: i32, %arg2: memref<8x1xf32, #tpu.memory_space<vmem>>, %arg3: memref<8x256xf32, #tpu.memory_space<vmem>>) attributes {dimension_semantics = [#tpu.dimension_semantics<parallel>, #tpu.dimension_semantics<parallel>], iteration_bounds = array<i64: 1, 1>, scalar_prefetch = 0 : i64, scratch_operands = 0 : i64, tpu.core_type = #tpu.core_type<tc>, window_params = [{transform_indices = @transform_0, window_bounds = array<i64: 8, 1>}, {transform_indices = @transform_1, window_bounds = array<i64: 8, 256>}]} {
    %c0 = arith.constant 0 : index
    %c0_0 = arith.constant 0 : index
    %0 = vector.load %arg2[%c0, %c0_0] : memref<8x1xf32, #tpu.memory_space<vmem>>, vector<8x1xf32>
    %1 = vector.shape_cast %0 : vector<8x1xf32> to vector<8x1xf32>
    %2 = vector.broadcast %1 : vector<8x1xf32> to vector<8x256xf32>
    %c0_1 = arith.constant 0 : index
    %c0_2 = arith.constant 0 : index
    %3 = vector.load %arg3[%c0_1, %c0_2] : memref<8x256xf32, #tpu.memory_space<vmem>>, vector<8x256xf32>
    tpu.vector_store %arg3[%c0_1, %c0_2], %2 {strides = array<i32>} : memref<8x256xf32, #tpu.memory_space<vmem>>, vector<8x256xf32>,
    return
  }
  func.func @transform_0(%arg0: i32, %arg1: i32) -> (i32, i32) {
    %c0_i32 = arith.constant 0 : i32
    %c0_i32_0 = arith.constant 0 : i32
    return %arg0, %c0_i32 : i32, i32
  }
  func.func @transform_1(%arg0: i32, %arg1: i32) -> (i32, i32) {
    %c0_i32 = arith.constant 0 : i32
    return %arg0, %arg1 : i32, i32
  }
}

</mosaic_0001>

<llo_original>
// kernel: tpu_custom_call.1
$region0: #{tpu_custom_call.1}
  #allocation0 [shape = 'u32[]', space=smem, size = 0x4, offset = 0x4, fixed_abs, tag = 'smem constant byte address 0x4 - core index']
  #allocation1 [shape = 'u32[144,128]{1,0:T(1,128)}', space=vmem, size = 0x12000, scoped, tag = 'internal scratch']
  %s0 = inlined_call_operand.vmem [shape: f32[8,1], index: 0, kind: input, shape index: {}]
  %s1 = inlined_call_operand.hbm [shape: f32[8,256], index: 1, kind: output, shape index: {}]
  %s2 = sld [smem:[#allocation0]]
  $region14: #{tpu_custom_call.1} parent=0
    _
  %s4 = ssub.s32 1, %s2
  %s5 = scalar_select 0, %s4, %s2
  $region1: #{tpu_custom_call.1} parent=0
    #allocation2 [shape = 'u8[8192]{0}', space=vmem, size = 0x2000, scoped, tag = 'output window, operand 0, single buffered']
    #allocation3 [shape = 's32[1]{0}', space=sflag, size = 0x4, scoped, tag = 'scoped memory for tpu_custom_call.1']
    %6 = vsyncpa [#allocation3], 0
    // Predicated region
    $region2: #{tpu_custom_call.1} parent=1 // pred_check
      _
    $region3: #{tpu_custom_call.1} parent=1 // pred_check_branch
      %8 = sbr.rel (0) target = $region5
    $region4: #{tpu_custom_call.1} parent=1 // pred_region
      _
    $region5: #{tpu_custom_call.1} parent=1 // pred_fallthru
      _
    %v9 = vld [vmem:[%s0] sm:$0xff]
    %11 = vset.pattern.permute.xlu0 0
    %12 = vperm.xlu0 %11, %v9
    %v13 = vpop.permute.xlu0 %12
    %15 = vst [vmem:[#allocation2] sm:$0xff] %v13
    %16 = vst [vmem:[#allocation2 + $0x8] sm:$0xff] %v13
    // Predicated region
    $region6: #{tpu_custom_call.1} parent=1 // pred_check
      _
    $region7: #{tpu_custom_call.1} parent=1 // pred_check_branch
      %18 = sbr.rel (0) target = $region9
    $region8: #{tpu_custom_call.1} parent=1 // pred_region
      %s20 = ssub.s32 256, 256
      %21 = vsyncadd [#allocation3], %s20
      %s23 = sshll.u32 [#allocation2], 4
      %s24 = int_to_ptr.vmem [resolvable:$true] %s23
      %26 = dma.vmem_to_hbm [thread:$0]  %s24, 256, %s1, [#allocation3]
    $region9: #{tpu_custom_call.1} parent=1 // pred_fallthru
      _
    // Predicated region
    $region10: #{tpu_custom_call.1} parent=1 // pred_check
      _
    $region11: #{tpu_custom_call.1} parent=1 // pred_check_branch
      %28 = sbr.rel (0) target = $region13
    $region12: #{tpu_custom_call.1} parent=1 // pred_region
      %29 = dma.done [#allocation3], 256
    $region13: #{tpu_custom_call.1} parent=1 // pred_fallthru
      _
    %30 = vsyncpa [#allocation3], 1

</llo_original>
